<compile_context>
chip_gen: v7x
topology: tpu7x:2x2x1
jax: 0.10.0
libtpu: 0.0.40
codegen_flags: <defaults>
</compile_context>

<pallas_src>
import jax
import jax.numpy as jnp
from jax import lax
from jax.experimental import pallas as pl
from jax.experimental.pallas import tpu as pltpu

LANE = 128
SUBLANE = 8
TM_DEFAULT = 512  # batch-row tile; good fit for v5e/v6e/v7x scoped VMEM budgets


def _round_up(x, m):
    return (x + m - 1) // m * m


# ---------------------------------------------------------------------------
# Fused kernel: (conv∘flatten∘fc1)+relu -> fc2+relu -> fc3
# bf16 operands -> MXU; f32 accumulate / bias-add / ReLU -> VPU (v5e-safe).
# ---------------------------------------------------------------------------
def _fused_aecnn_kernel(x_ref, w1_ref, b1_ref, w2_ref, b2_ref, w3_ref, b3_ref,
                        o_ref):
    x = x_ref[...].astype(jnp.bfloat16)
    h = jnp.dot(x, w1_ref[...], preferred_element_type=jnp.float32) + b1_ref[...]
    h = jnp.maximum(h, 0.0)
    h = jnp.dot(h.astype(jnp.bfloat16), w2_ref[...],
                preferred_element_type=jnp.float32) + b2_ref[...]
    h = jnp.maximum(h, 0.0)
    o_ref[...] = jnp.dot(h.astype(jnp.bfloat16), w3_ref[...],
                         preferred_element_type=jnp.float32) + b3_ref[...]


# ---------------------------------------------------------------------------
# One-time parameter packing: fold conv into fc1, transpose, lane-pad, bf16.
# ---------------------------------------------------------------------------
def pack_params(params, in_shape=(4, 8, 8)):
    Cin, H, W = in_shape
    wc = params["wc"].astype(jnp.float32)          # (Cout, Cin, KH, KW)
    bc = params["bc"].astype(jnp.float32)          # (Cout,)
    Cout, _, KH, KW = wc.shape
    OH, OW = H - KH + 1, W - KW + 1
    Din = Cin * H * W                               # 256
    Dconv = Cout * OH * OW                          # 600

    # Effective linear map of the (linear) conv stage:
    #   flatten_NCHW(conv(x)) == x_flat @ M + b_flat   (built by pushing the
    # identity basis through the conv once, at pack time).
    eye = jnp.eye(Din, dtype=jnp.float32).reshape(Din, Cin, H, W)
    M = lax.conv_general_dilated(
        eye, wc, window_strides=(1, 1), padding="VALID",
        dimension_numbers=("NCHW", "OIHW", "NCHW"),
    ).reshape(Din, Dconv)                           # (256, 600)
    b_flat = jnp.broadcast_to(bc[:, None, None], (Cout, OH, OW)).reshape(Dconv)

    w1 = params["w1"].astype(jnp.float32)           # (80, 600)
    b1 = params["b1"].astype(jnp.float32)
    w2 = params["w2"].astype(jnp.float32)           # (40, 80)
    b2 = params["b2"].astype(jnp.float32)
    w3 = params["w3"].astype(jnp.float32)           # (4, 40)
    b3 = params["b3"].astype(jnp.float32)
    H1, H2, DO = w1.shape[0], w2.shape[0], w3.shape[0]

    # Fold conv + flatten into fc1 (all in f32, then quantize to bf16 once).
    w1c = M @ w1.T                                  # (256, 80)
    b1c = b_flat @ w1.T + b1                        # (80,)

    Dp = _round_up(Din, LANE)                       # 256
    H1p = _round_up(H1, LANE)                       # 128
    H2p = _round_up(H2, LANE)                       # 128
    DOp = _round_up(DO, LANE)                       # 128

    def pad2(a, rows, cols):
        return jnp.pad(a, ((0, rows - a.shape[0]), (0, cols - a.shape[1])))

    return {
        # bf16 weights: halves the dominant weight DMA; MXU takes bf16 natively.
        "w1": pad2(w1c, Dp, H1p).astype(jnp.bfloat16),
        "w2": pad2(w2.T, H1p, H2p).astype(jnp.bfloat16),
        "w3": pad2(w3.T, H2p, DOp).astype(jnp.bfloat16),
        # Biases stay f32 (bias-add / ReLU run in f32 on the VPU; v5e-safe).
        "b1": pad2(b1c[None, :], 1, H1p),
        "b2": pad2(b2[None, :], 1, H2p),
        "b3": pad2(b3[None, :], 1, DOp),
        "meta": (Din, Dp, H1p, H2p, DOp, DO),
    }


# ---------------------------------------------------------------------------
# Forward: one fused pallas_call.
#   N <= tm : single whole-array block, no grid (no per-step overhead, no
#             wrapper row pad/slice launches).
#   N  > tm : batch-tiled "parallel" grid; weights constant index_map (DMA'd
#             once), x/out tiles double-buffered, rows shard across v7x cores.
# ---------------------------------------------------------------------------
def aecnn_forward(x, packed, *, tm=TM_DEFAULT):
    Din, Dp, H1p, H2p, DOp, DO = packed["meta"]
    N = x.shape[0]
    xf = x.reshape(N, -1)                           # PyTorch .view(-1, C*H*W)
    if xf.dtype not in (jnp.float32, jnp.bfloat16):
        xf = xf.astype(jnp.float32)
    if Dp != Din:                                   # lane pad (no-op: 256==256)
        xf = jnp.pad(xf, ((0, 0), (0, Dp - Din)))

    args = (xf, packed["w1"], packed["b1"], packed["w2"], packed["b2"],
            packed["w3"], packed["b3"])
    w_bytes = sum(int(packed[k].size) * packed[k].dtype.itemsize
                  for k in ("w1", "b1", "w2", "b2", "w3", "b3"))
    cost = pl.CostEstimate(
        flops=2 * N * (Dp * H1p + H1p * H2p + H2p * DOp),
        transcendentals=0,
        bytes_accessed=int(xf.size) * xf.dtype.itemsize + w_bytes + N * DOp * 4,
    )
    out_shape = jax.ShapeDtypeStruct((N, DOp), jnp.float32)

    if N <= tm:
        out = pl.pallas_call(
            _fused_aecnn_kernel,
            out_shape=out_shape,
            cost_estimate=cost,
        )(*args)
    else:
        out = pl.pallas_call(
            _fused_aecnn_kernel,
            out_shape=out_shape,
            grid=(pl.cdiv(N, tm),),
            in_specs=[
                pl.BlockSpec((tm, Dp), lambda i: (i, 0)),
                pl.BlockSpec((Dp, H1p), lambda i: (0, 0)),
                pl.BlockSpec((1, H1p), lambda i: (0, 0)),
                pl.BlockSpec((H1p, H2p), lambda i: (0, 0)),
                pl.BlockSpec((1, H2p), lambda i: (0, 0)),
                pl.BlockSpec((H2p, DOp), lambda i: (0, 0)),
                pl.BlockSpec((1, DOp), lambda i: (0, 0)),
            ],
            out_specs=pl.BlockSpec((tm, DOp), lambda i: (i, 0)),
            compiler_params=pltpu.CompilerParams(
                dimension_semantics=("parallel",)),
            cost_estimate=cost,
        )(*args)

    # Lane slice only; the kernel keeps a lane-dense 128-wide output slab.
    return out[:, :DO]


# ---------------------------------------------------------------------------
# Deterministic parameter init (PyTorch-style uniform(-1/sqrt(fan_in), ...))
# ---------------------------------------------------------------------------
def init_params(key):
    def uni(k, shape, fan_in):
        bound = 1.0 / jnp.sqrt(float(fan_in))
        return jax.random.uniform(k, shape, jnp.float32, -bound, bound)

    ks = jax.random.split(key, 8)
    return {
        "wc": uni(ks[0], (24, 4, 4, 4), 4 * 4 * 4),
        "bc": uni(ks[1], (24,), 4 * 4 * 4),
        "w1": uni(ks[2], (80, 600), 600),
        "b1": uni(ks[3], (80,), 600),
        "w2": uni(ks[4], (40, 80), 80),
        "b2": uni(ks[5], (40,), 80),
        "w3": uni(ks[6], (4, 40), 40),
        "b3": uni(ks[7], (4,), 40),
    }


def reference_forward(x, p):
    feat = lax.conv_general_dilated(
        x, p["wc"], window_strides=(1, 1), padding="VALID",
        dimension_numbers=("NCHW", "OIHW", "NCHW"),
    ) + p["bc"][None, :, None, None]
    xf = feat.reshape(x.shape[0], -1)
    h = jnp.maximum(xf @ p["w1"].T + p["b1"], 0.0)
    h = jnp.maximum(h @ p["w2"].T + p["b2"], 0.0)
    return h @ p["w3"].T + p["b3"]


if __name__ == "__main__":
    key = jax.random.PRNGKey(0)
    kx, kp, kb = jax.random.split(key, 3)

    params = init_params(kp)
    packed = pack_params(params, in_shape=(4, 8, 8))   # one-time packing
    packed = jax.tree_util.tree_map(
        lambda a: jax.block_until_ready(a) if isinstance(a, jax.Array) else a,
        packed,
    )

    # --- Small batch: single whole-array block path (no grid). -------------
    # Input NCHW (2, 4, 8, 8) -> Conv2d(4,24,4) valid -> (2,24,5,5) -> 600.
    x_small = jax.random.normal(kx, (2, 4, 8, 8), jnp.float32)
    out_small = jax.block_until_ready(aecnn_forward(x_small, packed))
    ref_small = reference_forward(x_small, params)
    assert out_small.shape == (2, 4), out_small.shape
    assert jnp.allclose(out_small, ref_small, atol=5e-2, rtol=5e-2), \
        "small-batch mismatch vs reference"

    # --- Large batch: batch-tiled "parallel" grid path. --------------------
    x_big = jax.random.normal(kb, (1024, 4, 8, 8), jnp.float32)
    out_big = jax.block_until_ready(aecnn_forward(x_big, packed))
    ref_big = reference_forward(x_big, params)
    assert out_big.shape == (1024, 4), out_big.shape
    assert jnp.allclose(out_big, ref_big, atol=5e-2, rtol=5e-2), \
        "large-batch mismatch vs reference"

    print("KERNEL_OK")
</pallas_src>

<mosaic_0001>
module attributes {stable_mosaic.version = 11 : i64} {
  func.func @_fused_aecnn_kernel(%arg0: memref<2x256xf32, #tpu.memory_space<vmem>>, %arg1: memref<256x128xbf16, #tpu.memory_space<vmem>>, %arg2: memref<1x128xf32, #tpu.memory_space<vmem>>, %arg3: memref<128x128xbf16, #tpu.memory_space<vmem>>, %arg4: memref<1x128xf32, #tpu.memory_space<vmem>>, %arg5: memref<128x128xbf16, #tpu.memory_space<vmem>>, %arg6: memref<1x128xf32, #tpu.memory_space<vmem>>, %arg7: memref<2x128xf32, #tpu.memory_space<vmem>>) attributes {dimension_semantics = [], scalar_prefetch = 0 : i64, scratch_operands = 0 : i64, tpu.core_type = #tpu.core_type<tc>} {
    %c0 = arith.constant 0 : index
    %c0_0 = arith.constant 0 : index
    %0 = vector.load %arg0[%c0, %c0_0] : memref<2x256xf32, #tpu.memory_space<vmem>>, vector<2x256xf32>
    %1 = arith.truncf %0 : vector<2x256xf32> to vector<2x256xbf16>
    %c0_1 = arith.constant 0 : index
    %c0_2 = arith.constant 0 : index
    %2 = vector.load %arg1[%c0_1, %c0_2] : memref<256x128xbf16, #tpu.memory_space<vmem>>, vector<256x128xbf16>
    %cst = arith.constant dense<0.000000e+00> : vector<2x128xf32>
    %3 = tpu.matmul %1, %2, %cst {dimension_numbers = #tpu.dot_dimension_numbers<[1], [0], [0], [1], [0, 0, 1, 1], [], []>} : vector<2x256xbf16>, vector<256x128xbf16>, vector<2x128xf32> -> vector<2x128xf32>
    %c0_3 = arith.constant 0 : index
    %c0_4 = arith.constant 0 : index
    %4 = vector.load %arg2[%c0_3, %c0_4] : memref<1x128xf32, #tpu.memory_space<vmem>>, vector<1x128xf32>
    %5 = vector.broadcast %4 : vector<1x128xf32> to vector<2x128xf32>
    %6 = arith.addf %3, %5 : vector<2x128xf32>
    %cst_5 = arith.constant 0.000000e+00 : f32
    %7 = vector.broadcast %cst_5 : f32 to vector<2x128xf32>
    %8 = arith.maximumf %6, %7 : vector<2x128xf32>
    %9 = arith.truncf %8 : vector<2x128xf32> to vector<2x128xbf16>
    %c0_6 = arith.constant 0 : index
    %c0_7 = arith.constant 0 : index
    %10 = vector.load %arg3[%c0_6, %c0_7] : memref<128x128xbf16, #tpu.memory_space<vmem>>, vector<128x128xbf16>
    %cst_8 = arith.constant dense<0.000000e+00> : vector<2x128xf32>
    %11 = tpu.matmul %9, %10, %cst_8 {dimension_numbers = #tpu.dot_dimension_numbers<[1], [0], [0], [1], [0, 0, 1, 1], [], []>} : vector<2x128xbf16>, vector<128x128xbf16>, vector<2x128xf32> -> vector<2x128xf32>
    %c0_9 = arith.constant 0 : index
    %c0_10 = arith.constant 0 : index
    %12 = vector.load %arg4[%c0_9, %c0_10] : memref<1x128xf32, #tpu.memory_space<vmem>>, vector<1x128xf32>
    %13 = vector.broadcast %12 : vector<1x128xf32> to vector<2x128xf32>
    %14 = arith.addf %11, %13 : vector<2x128xf32>
    %cst_11 = arith.constant 0.000000e+00 : f32
    %15 = vector.broadcast %cst_11 : f32 to vector<2x128xf32>
    %16 = arith.maximumf %14, %15 : vector<2x128xf32>
    %17 = arith.truncf %16 : vector<2x128xf32> to vector<2x128xbf16>
    %c0_12 = arith.constant 0 : index
    %c0_13 = arith.constant 0 : index
    %18 = vector.load %arg5[%c0_12, %c0_13] : memref<128x128xbf16, #tpu.memory_space<vmem>>, vector<128x128xbf16>
    %cst_14 = arith.constant dense<0.000000e+00> : vector<2x128xf32>
    %19 = tpu.matmul %17, %18, %cst_14 {dimension_numbers = #tpu.dot_dimension_numbers<[1], [0], [0], [1], [0, 0, 1, 1], [], []>} : vector<2x128xbf16>, vector<128x128xbf16>, vector<2x128xf32> -> vector<2x128xf32>
    %c0_15 = arith.constant 0 : index
    %c0_16 = arith.constant 0 : index
    %20 = vector.load %arg6[%c0_15, %c0_16] : memref<1x128xf32, #tpu.memory_space<vmem>>, vector<1x128xf32>
    %21 = vector.broadcast %20 : vector<1x128xf32> to vector<2x128xf32>
    %22 = arith.addf %19, %21 : vector<2x128xf32>
    %c0_17 = arith.constant 0 : index
    %c0_18 = arith.constant 0 : index
    %23 = vector.load %arg7[%c0_17, %c0_18] : memref<2x128xf32, #tpu.memory_space<vmem>>, vector<2x128xf32>
    tpu.vector_store %arg7[%c0_17, %c0_18], %22 {strides = array<i32>} : memref<2x128xf32, #tpu.memory_space<vmem>>, vector<2x128xf32>,
    return
  }
}

</mosaic_0001>

<llo_original>
// kernel: tpu_custom_call.1
$region0: #{tpu_custom_call.1}
  #allocation0 [shape = 'u32[]', space=smem, size = 0x4, offset = 0x4, fixed_abs, tag = 'smem constant byte address 0x4 - core index']
  #allocation1 [shape = 'u32[144,128]{1,0:T(1,128)}', space=vmem, size = 0x12000, scoped, tag = 'internal scratch']
  %s0 = inlined_call_operand.hbm [shape: f32[2,256], index: 0, kind: input, shape index: {}]
  %s1 = inlined_call_operand.hbm [shape: bf16[256,128], index: 1, kind: input, shape index: {}]
  %s2 = inlined_call_operand.vmem [shape: f32[1,128], index: 2, kind: input, shape index: {}]
  %s3 = inlined_call_operand.hbm [shape: bf16[128,128], index: 3, kind: input, shape index: {}]
  %s4 = inlined_call_operand.vmem [shape: f32[1,128], index: 4, kind: input, shape index: {}]
  %s5 = inlined_call_operand.hbm [shape: bf16[128,128], index: 5, kind: input, shape index: {}]
  %s6 = inlined_call_operand.vmem [shape: f32[1,128], index: 6, kind: input, shape index: {}]
  %s7 = inlined_call_operand.hbm [shape: f32[2,128], index: 7, kind: output, shape index: {}]
  %s8 = sld [smem:[#allocation0]]
  $region54: #{tpu_custom_call.1} parent=0
    _
  %s10 = ssub.s32 1, %s8
  %s11 = scalar_select 0, %s10, %s8
  $region1: #{tpu_custom_call.1} parent=0
    #allocation2 [shape = 'u8[2048]{0}', space=vmem, size = 0x800, scoped, tag = 'input window, operand 0, single buffered']
    #allocation3 [shape = 's32[1]{0}', space=sflag, size = 0x4, scoped, tag = 'scoped memory for tpu_custom_call.1']
    #allocation4 [shape = 's32[1]{0}', space=sflag, size = 0x4, scoped, tag = 'scoped memory for tpu_custom_call.1']
    #allocation5 [shape = 'u8[65536]{0}', space=vmem, size = 0x10000, scoped, tag = 'input window, operand 1, single buffered']
    #allocation6 [shape = 's32[1]{0}', space=sflag, size = 0x4, scoped, tag = 'scoped memory for tpu_custom_call.1']
    #allocation7 [shape = 'u8[32768]{0}', space=vmem, size = 0x8000, scoped, tag = 'input window, operand 3, single buffered']
    #allocation8 [shape = 'u8[32768]{0}', space=vmem, size = 0x8000, scoped, tag = 'input window, operand 5, single buffered']
    #allocation9 [shape = 's32[1]{0}', space=sflag, size = 0x4, scoped, tag = 'scoped memory for tpu_custom_call.1']
    #allocation10 [shape = 'u8[1024]{0}', space=vmem, size = 0x400, scoped, tag = 'output window, operand 0, single buffered']
    %12 = vsyncpa [#allocation3], 0
    %13 = vsyncpa [#allocation6], 0
    %14 = vsyncpa [#allocation9], 0
    %15 = vsyncpa [#allocation4], 0
    // Predicated region
    $region2: #{tpu_custom_call.1} parent=1 // pred_check
      _
    $region3: #{tpu_custom_call.1} parent=1 // pred_check_branch
      %17 = sbr.rel (0) target = $region5
    $region4: #{tpu_custom_call.1} parent=1 // pred_region
      %s19 = ssub.s32 64, 64
      %20 = vsyncadd [#allocation3], %s19
      %s22 = sshll.u32 [#allocation2], 4
      %s23 = int_to_ptr.vmem [resolvable:$true] %s22
      %25 = dma.hbm_to_vmem [thread:$0]  %s0, 64, %s23, [#allocation3]
    $region5: #{tpu_custom_call.1} parent=1 // pred_fallthru
      _
    // Predicated region
    $region6: #{tpu_custom_call.1} parent=1 // pred_check
      _
    $region7: #{tpu_custom_call.1} parent=1 // pred_check_branch
      %27 = sbr.rel (0) target = $region9
    $region8: #{tpu_custom_call.1} parent=1 // pred_region
      %s29 = ssub.s32 2048, 2048
      %30 = vsyncadd [#allocation6], %s29
      %s31 = sshll.u32 [#allocation5], 4
      %s32 = int_to_ptr.vmem [resolvable:$true] %s31
      %37 = dma.hbm_to_vmem [thread:$0]  %s1, 2048, %s32, [#allocation6], 64, 64, 4
    $region9: #{tpu_custom_call.1} parent=1 // pred_fallthru
      _
    // Predicated region
    $region10: #{tpu_custom_call.1} parent=1 // pred_check
      _
    $region11: #{tpu_custom_call.1} parent=1 // pred_check_branch
      %39 = sbr.rel (0) target = $region13
    $region12: #{tpu_custom_call.1} parent=1 // pred_region
      _
    $region13: #{tpu_custom_call.1} parent=1 // pred_fallthru
      _
    // Predicated region
    $region14: #{tpu_custom_call.1} parent=1 // pred_check
      _
    $region15: #{tpu_custom_call.1} parent=1 // pred_check_branch
      %41 = sbr.rel (0) target = $region17
    $region16: #{tpu_custom_call.1} parent=1 // pred_region
      %s43 = ssub.s32 1024, 1024
      %44 = vsyncadd [#allocation6], %s43
      %s45 = sshll.u32 [#allocation7], 4
      %s46 = int_to_ptr.vmem [resolvable:$true] %s45
      %51 = dma.hbm_to_vmem [thread:$0]  %s3, 1024, %s46, [#allocation6], 64, 64, 4
    $region17: #{tpu_custom_call.1} parent=1 // pred_fallthru
      _
    // Predicated region
    $region18: #{tpu_custom_call.1} parent=1 // pred_check
      _
    $region19: #{tpu_custom_call.1} parent=1 // pred_check_branch
      %53 = sbr.rel (0) target = $region21
    $region20: #{tpu_custom_call.1} parent=1 // pred_region
      _
    $region21: #{tpu_custom_call.1} parent=1 // pred_fallthru
      _
    // Predicated region
    $region22: #{tpu_custom_call.1} parent=1 // pred_check
      _
    $region23: #{tpu_custom_call.1} parent=1 // pred_check_branch
      %55 = sbr.rel (0) target = $region25
    $region24: #{tpu_custom_call.1} parent=1 // pred_region
      %s57 = ssub.s32 1024, 1024
      %58 = vsyncadd [#allocation9], %s57
      %s59 = sshll.u32 [#allocation8], 4
      %s60 = int_to_ptr.vmem [resolvable:$true] %s59
      %65 = dma.hbm_to_vmem [thread:$0]  %s5, 1024, %s60, [#allocation9], 64, 64, 4
    $region25: #{tpu_custom_call.1} parent=1 // pred_fallthru
      _
    // Predicated region
    $region26: #{tpu_custom_call.1} parent=1 // pred_check
      _
    $region27: #{tpu_custom_call.1} parent=1 // pred_check_branch
      %67 = sbr.rel (0) target = $region29
    $region28: #{tpu_custom_call.1} parent=1 // pred_region
      _
    $region29: #{tpu_custom_call.1} parent=1 // pred_fallthru
      _
    // Predicated region
    $region30: #{tpu_custom_call.1} parent=1 // pred_check
      _
    $region31: #{tpu_custom_call.1} parent=1 // pred_check_branch
      %69 = sbr.rel (0) target = $region33
    $region32: #{tpu_custom_call.1} parent=1 // pred_region
      %70 = dma.done [#allocation3], 64
    $region33: #{tpu_custom_call.1} parent=1 // pred_fallthru
      _
    // Predicated region
    $region34: #{tpu_custom_call.1} parent=1 // pred_check
      _
    $region35: #{tpu_custom_call.1} parent=1 // pred_check_branch
      %72 = sbr.rel (0) target = $region37
    $region36: #{tpu_custom_call.1} parent=1 // pred_region
      %73 = dma.done [#allocation6], 2048
    $region37: #{tpu_custom_call.1} parent=1 // pred_fallthru
      _
    // Predicated region
    $region38: #{tpu_custom_call.1} parent=1 // pred_check
      _
    $region39: #{tpu_custom_call.1} parent=1 // pred_check_branch
      %75 = sbr.rel (0) target = $region41
    $region40: #{tpu_custom_call.1} parent=1 // pred_region
      %76 = dma.done [#allocation6], 1024
    $region41: #{tpu_custom_call.1} parent=1 // pred_fallthru
      _
    // Predicated region
    $region42: #{tpu_custom_call.1} parent=1 // pred_check
      _
    $region43: #{tpu_custom_call.1} parent=1 // pred_check_branch
      %78 = sbr.rel (0) target = $region45
    $region44: #{tpu_custom_call.1} parent=1 // pred_region
      %79 = dma.done [#allocation9], 1024
    $region45: #{tpu_custom_call.1} parent=1 // pred_fallthru
      _
    %v81 = vld [vmem:[#allocation2] sm:$0xf]
    %v84 = vunpack.c.l.s4 1983009808
    %v85 = vunpack.c.0.s8 %v84
    %v86 = vlaneseq
    %v87 = vshrl.u32 %v86, 7
    %v88 = vsub.s32 %v85, %v87
    %v89 = vrot.slane %v81, %v88
    %v90 = vcombine.high %v89, %v89
    %v93 = vpack.c.bf16 %v89, %v89
    %v94 = vpack.c.bf16 %v90, %v90
    %v95 = vld [vmem:[#allocation5] sm:$0xf]
    %v96 = vld [vmem:[#allocation5 + $0x4] sm:$0xf]
    %v97 = vld [vmem:[#allocation5 + $0x8] sm:$0xf]
    %v98 = vld [vmem:[#allocation5 + $0xc] sm:$0xf]
    %v99 = vld [vmem:[#allocation5 + $0x10] sm:$0xf]
    %v100 = vld [vmem:[#allocation5 + $0x14] sm:$0xf]
    %v101 = vld [vmem:[#allocation5 + $0x18] sm:$0xf]
    %v102 = vld [vmem:[#allocation5 + $0x1c] sm:$0xf]
    %v103 = vld [vmem:[#allocation5 + $0x20] sm:$0xf]
    %v104 = vld [vmem:[#allocation5 + $0x24] sm:$0xf]
    %v105 = vld [vmem:[#allocation5 + $0x28] sm:$0xf]
    %v106 = vld [vmem:[#allocation5 + $0x2c] sm:$0xf]
    %v107 = vld [vmem:[#allocation5 + $0x30] sm:$0xf]
    %v108 = vld [vmem:[#allocation5 + $0x34] sm:$0xf]
    %v109 = vld [vmem:[#allocation5 + $0x38] sm:$0xf]
    %v110 = vld [vmem:[#allocation5 + $0x3c] sm:$0xf]
    %v111 = vld [vmem:[#allocation5 + $0x40] sm:$0xf]
    %v112 = vld [vmem:[#allocation5 + $0x44] sm:$0xf]
    %v113 = vld [vmem:[#allocation5 + $0x48] sm:$0xf]
    %v114 = vld [vmem:[#allocation5 + $0x4c] sm:$0xf]
    %v115 = vld [vmem:[#allocation5 + $0x50] sm:$0xf]
    %v116 = vld [vmem:[#allocation5 + $0x54] sm:$0xf]
    %v117 = vld [vmem:[#allocation5 + $0x58] sm:$0xf]
    %v118 = vld [vmem:[#allocation5 + $0x5c] sm:$0xf]
    %v119 = vld [vmem:[#allocation5 + $0x60] sm:$0xf]
    %v120 = vld [vmem:[#allocation5 + $0x64] sm:$0xf]
    %v121 = vld [vmem:[#allocation5 + $0x68] sm:$0xf]
    %v122 = vld [vmem:[#allocation5 + $0x6c] sm:$0xf]
    %v123 = vld [vmem:[#allocation5 + $0x70] sm:$0xf]
    %v124 = vld [vmem:[#allocation5 + $0x74] sm:$0xf]
    %v125 = vld [vmem:[#allocation5 + $0x78] sm:$0xf]
    %v126 = vld [vmem:[#allocation5 + $0x7c] sm:$0xf]
    %v127 = vld [vmem:[%s2] sm:$0x1]
    %v129 = vlaneseq
    %v130 = vshrl.u32 %v129, 7
    %v131 = vsub.s32 0, %v130
    %v132 = vrot.slane %v127, %v131
    %v166 = vunpack.c.l.b16 %v95
    %v167 = vunpack.c.l.b16 %v96
    %v168 = vunpack.c.l.b16 %v97
    %v169 = vunpack.c.l.b16 %v98
    %v170 = vunpack.c.l.b16 %v99
    %v171 = vunpack.c.l.b16 %v100
    %v172 = vunpack.c.l.b16 %v101
    %v173 = vunpack.c.l.b16 %v102
    %v174 = vunpack.c.l.b16 %v103
    %v175 = vunpack.c.l.b16 %v104
    %v176 = vunpack.c.l.b16 %v105
    %v177 = vunpack.c.l.b16 %v106
    %v178 = vunpack.c.l.b16 %v107
    %v179 = vunpack.c.l.b16 %v108
    %v180 = vunpack.c.l.b16 %v109
    %v181 = vunpack.c.l.b16 %v110
    %v182 = vunpack.c.l.b16 %v111
    %v183 = vunpack.c.l.b16 %v112
    %v184 = vunpack.c.l.b16 %v113
    %v185 = vunpack.c.l.b16 %v114
    %v186 = vunpack.c.l.b16 %v115
    %v187 = vunpack.c.l.b16 %v116
    %v188 = vunpack.c.l.b16 %v117
    %v189 = vunpack.c.l.b16 %v118
    %v190 = vunpack.c.l.b16 %v119
    %v191 = vunpack.c.l.b16 %v120
    %v192 = vunpack.c.l.b16 %v121
    %v193 = vunpack.c.l.b16 %v122
    %v194 = vunpack.c.l.b16 %v123
    %v195 = vunpack.c.l.b16 %v124
    %v196 = vunpack.c.l.b16 %v125
    %v197 = vunpack.c.l.b16 %v126
    %v198 = vpack.c.b16 %v167, %v166
    %v199 = vpack.c.b16 %v169, %v168
    %v200 = vpack.c.b16 %v171, %v170
    %v201 = vpack.c.b16 %v173, %v172
    %v202 = vpack.c.b16 %v175, %v174
    %v203 = vpack.c.b16 %v177, %v176
    %v204 = vpack.c.b16 %v179, %v178
    %v205 = vpack.c.b16 %v181, %v180
    %v206 = vpack.c.b16 %v183, %v182
    %v207 = vpack.c.b16 %v185, %v184
    %v208 = vpack.c.b16 %v187, %v186
    %v209 = vpack.c.b16 %v189, %v188
    %v210 = vpack.c.b16 %v191, %v190
    %v211 = vpack.c.b16 %v193, %v192
    %v212 = vpack.c.b16 %v195, %v194
    %v213 = vpack.c.b16 %v197, %v196
    %230 = vmatprep.subr.bf16.mxu0 0
    %231 = vmatpush1.bf16.msra.mxu0 %v198
    %232 = vmatprep.subr.bf16.mxu0 0
    %233 = vmatpush1.bf16.msra.mxu0 %v199
    %234 = vmatprep.subr.bf16.mxu0 0
    %235 = vmatpush1.bf16.msra.mxu0 %v200
    %236 = vmatprep.subr.bf16.mxu0 0
    %237 = vmatpush1.bf16.msra.mxu0 %v201
    %238 = vmatprep.subr.bf16.mxu0 0
    %239 = vmatpush1.bf16.msra.mxu0 %v202
    %240 = vmatprep.subr.bf16.mxu0 0
    %241 = vmatpush1.bf16.msra.mxu0 %v203
    %242 = vmatprep.subr.bf16.mxu0 0
    %243 = vmatpush1.bf16.msra.mxu0 %v204
    %244 = vmatprep.subr.bf16.mxu0 0
    %245 = vmatpush1.bf16.msra.mxu0 %v205
    %246 = vmatprep.subr.bf16.mxu0 0
    %247 = vmatpush1.bf16.msra.mxu0 %v206
    %248 = vmatprep.subr.bf16.mxu0 0
    %249 = vmatpush1.bf16.msra.mxu0 %v207
    %250 = vmatprep.subr.bf16.mxu0 0
    %251 = vmatpush1.bf16.msra.mxu0 %v208
    %252 = vmatprep.subr.bf16.mxu0 0
    %253 = vmatpush1.bf16.msra.mxu0 %v209
    %254 = vmatprep.subr.bf16.mxu0 0
    %255 = vmatpush1.bf16.msra.mxu0 %v210
    %256 = vmatprep.subr.bf16.mxu0 0
    %257 = vmatpush1.bf16.msra.mxu0 %v211
    %258 = vmatprep.subr.bf16.mxu0 0
    %259 = vmatpush1.bf16.msra.mxu0 %v212
    %260 = vmatprep.subr.bf16.mxu0 0
    %261 = vmatpush1.bf16.msra.mxu0 %v213
    %262 = vmatprep.mubr.bf16.mxu0 %v94
    %263 = vmatmul.mubr.bf16.gmra.mrb[0].mxu0 %v93
    %v264 = vpop.f32.mrb[0].mxu0
    %v265 = vadd.f32 %v132, %v264
    %v266 = vpop.f32.mrb[0].mxu0
    %v267 = vpop.f32.mrb[0].mxu0
    %v268 = vpop.f32.mrb[0].mxu0
    %269 = vdwg.mxu0
    %v270 = vmax.f32 %v265, 0.0
    %v271 = vpack.c.bf16 %v270, %v270
    %v272 = vld [vmem:[#allocation7] sm:$0xf]
    %v273 = vld [vmem:[#allocation7 + $0x4] sm:$0xf]
    %v274 = vld [vmem:[#allocation7 + $0x8] sm:$0xf]
    %v275 = vld [vmem:[#allocation7 + $0xc] sm:$0xf]
    %v276 = vld [vmem:[#allocation7 + $0x10] sm:$0xf]
    %v277 = vld [vmem:[#allocation7 + $0x14] sm:$0xf]
    %v278 = vld [vmem:[#allocation7 + $0x18] sm:$0xf]
    %v279 = vld [vmem:[#allocation7 + $0x1c] sm:$0xf]
    %v280 = vld [vmem:[#allocation7 + $0x20] sm:$0xf]
    %v281 = vld [vmem:[#allocation7 + $0x24] sm:$0xf]
    %v282 = vld [vmem:[#allocation7 + $0x28] sm:$0xf]
    %v283 = vld [vmem:[#allocation7 + $0x2c] sm:$0xf]
    %v284 = vld [vmem:[#allocation7 + $0x30] sm:$0xf]
    %v285 = vld [vmem:[#allocation7 + $0x34] sm:$0xf]
    %v286 = vld [vmem:[#allocation7 + $0x38] sm:$0xf]
    %v287 = vld [vmem:[#allocation7 + $0x3c] sm:$0xf]
    %v288 = vld [vmem:[%s4] sm:$0x1]
    %v290 = vlaneseq
    %v291 = vshrl.u32 %v290, 7
    %v292 = vsub.s32 0, %v291
    %v293 = vrot.slane %v288, %v292
    %v311 = vunpack.c.l.b16 %v272
    %v312 = vunpack.c.l.b16 %v273
    %v313 = vunpack.c.l.b16 %v274
    %v314 = vunpack.c.l.b16 %v275
    %v315 = vunpack.c.l.b16 %v276
    %v316 = vunpack.c.l.b16 %v277
    %v317 = vunpack.c.l.b16 %v278
    %v318 = vunpack.c.l.b16 %v279
    %v319 = vunpack.c.l.b16 %v280
    %v320 = vunpack.c.l.b16 %v281
    %v321 = vunpack.c.l.b16 %v282
    %v322 = vunpack.c.l.b16 %v283
    %v323 = vunpack.c.l.b16 %v284
    %v324 = vunpack.c.l.b16 %v285
    %v325 = vunpack.c.l.b16 %v286
    %v326 = vunpack.c.l.b16 %v287
    %v327 = vpack.c.b16 %v312, %v311
    %v328 = vpack.c.b16 %v314, %v313
    %v329 = vpack.c.b16 %v316, %v315
    %v330 = vpack.c.b16 %v318, %v317
    %v331 = vpack.c.b16 %v320, %v319
    %v332 = vpack.c.b16 %v322, %v321
    %v333 = vpack.c.b16 %v324, %v323
    %v334 = vpack.c.b16 %v326, %v325
    %343 = vmatprep.subr.bf16.mxu0 0
    %344 = vmatpush1.bf16.msra.mxu0 %v327
    %345 = vmatprep.subr.bf16.mxu0 0
    %346 = vmatpush1.bf16.msra.mxu0 %v328
    %347 = vmatprep.subr.bf16.mxu0 0
    %348 = vmatpush1.bf16.msra.mxu0 %v329
    %349 = vmatprep.subr.bf16.mxu0 0
    %350 = vmatpush1.bf16.msra.mxu0 %v330
    %351 = vmatprep.subr.bf16.mxu0 0
    %352 = vmatpush1.bf16.msra.mxu0 %v331
    %353 = vmatprep.subr.bf16.mxu0 0
    %354 = vmatpush1.bf16.msra.mxu0 %v332
    %355 = vmatprep.subr.bf16.mxu0 0
    %356 = vmatpush1.bf16.msra.mxu0 %v333
    %357 = vmatprep.subr.bf16.mxu0 0
    %358 = vmatpush1.bf16.msra.mxu0 %v334
    %359 = vmatprep.subr.bf16.mxu0 0
    %360 = vmatpush1.bf16.msra.mxu0 0
    %361 = vmatprep.subr.bf16.mxu0 0
    %362 = vmatpush1.bf16.msra.mxu0 0
    %363 = vmatprep.subr.bf16.mxu0 0
    %364 = vmatpush1.bf16.msra.mxu0 0
    %365 = vmatprep.subr.bf16.mxu0 0
    %366 = vmatpush1.bf16.msra.mxu0 0
    %367 = vmatprep.subr.bf16.mxu0 0
    %368 = vmatpush1.bf16.msra.mxu0 0
    %369 = vmatprep.subr.bf16.mxu0 0
    %370 = vmatpush1.bf16.msra.mxu0 0
    %371 = vmatprep.subr.bf16.mxu0 0
    %372 = vmatpush1.bf16.msra.mxu0 0
    %373 = vmatprep.subr.bf16.mxu0 0
    %374 = vmatpush1.bf16.msra.mxu0 0
    %375 = vmatprep.mubr.bf16.mxu0 0
    %376 = vmatmul.mubr.bf16.gmra.mrb[0].mxu0 %v271
    %v377 = vpop.f32.mrb[0].mxu0
    %v378 = vadd.f32 %v293, %v377
    %v379 = vpop.f32.mrb[0].mxu0
    %v380 = vpop.f32.mrb[0].mxu0
    %v381 = vpop.f32.mrb[0].mxu0
    %382 = vdwg.mxu0
    %v383 = vmax.f32 %v378, 0.0
    %v384 = vpack.c.bf16 %v383, %v383
    %v385 = vld [vmem:[#allocation8] sm:$0xf]
    %v386 = vld [vmem:[#allocation8 + $0x4] sm:$0xf]
    %v387 = vld [vmem:[#allocation8 + $0x8] sm:$0xf]
    %v388 = vld [vmem:[#allocation8 + $0xc] sm:$0xf]
    %v389 = vld [vmem:[#allocation8 + $0x10] sm:$0xf]
    %v390 = vld [vmem:[#allocation8 + $0x14] sm:$0xf]
    %v391 = vld [vmem:[#allocation8 + $0x18] sm:$0xf]
    %v392 = vld [vmem:[#allocation8 + $0x1c] sm:$0xf]
    %v393 = vld [vmem:[#allocation8 + $0x20] sm:$0xf]
    %v394 = vld [vmem:[#allocation8 + $0x24] sm:$0xf]
    %v395 = vld [vmem:[#allocation8 + $0x28] sm:$0xf]
    %v396 = vld [vmem:[#allocation8 + $0x2c] sm:$0xf]
    %v397 = vld [vmem:[#allocation8 + $0x30] sm:$0xf]
    %v398 = vld [vmem:[#allocation8 + $0x34] sm:$0xf]
    %v399 = vld [vmem:[#allocation8 + $0x38] sm:$0xf]
    %v400 = vld [vmem:[#allocation8 + $0x3c] sm:$0xf]
    %v401 = vld [vmem:[%s6] sm:$0x1]
    %v403 = vlaneseq
    %v404 = vshrl.u32 %v403, 7
    %v405 = vsub.s32 0, %v404
    %v406 = vrot.slane %v401, %v405
    %v424 = vunpack.c.l.b16 %v385
    %v425 = vunpack.c.l.b16 %v386
    %v426 = vunpack.c.l.b16 %v387
    %v427 = vunpack.c.l.b16 %v388
    %v428 = vunpack.c.l.b16 %v389
    %v429 = vunpack.c.l.b16 %v390
    %v430 = vunpack.c.l.b16 %v391
    %v431 = vunpack.c.l.b16 %v392
    %v432 = vunpack.c.l.b16 %v393
    %v433 = vunpack.c.l.b16 %v394
    %v434 = vunpack.c.l.b16 %v395
    %v435 = vunpack.c.l.b16 %v396
    %v436 = vunpack.c.l.b16 %v397
    %v437 = vunpack.c.l.b16 %v398
    %v438 = vunpack.c.l.b16 %v399
    %v439 = vunpack.c.l.b16 %v400
    %v440 = vpack.c.b16 %v425, %v424
    %v441 = vpack.c.b16 %v427, %v426
    %v442 = vpack.c.b16 %v429, %v428
    %v443 = vpack.c.b16 %v431, %v430
    %v444 = vpack.c.b16 %v433, %v432
    %v445 = vpack.c.b16 %v435, %v434
    %v446 = vpack.c.b16 %v437, %v436
    %v447 = vpack.c.b16 %v439, %v438
    %456 = vmatprep.subr.bf16.mxu0 0
    %457 = vmatpush1.bf16.msra.mxu0 %v440
    %458 = vmatprep.subr.bf16.mxu0 0
    %459 = vmatpush1.bf16.msra.mxu0 %v441
    %460 = vmatprep.subr.bf16.mxu0 0
    %461 = vmatpush1.bf16.msra.mxu0 %v442
    %462 = vmatprep.subr.bf16.mxu0 0
    %463 = vmatpush1.bf16.msra.mxu0 %v443
    %464 = vmatprep.subr.bf16.mxu0 0
    %465 = vmatpush1.bf16.msra.mxu0 %v444
    %466 = vmatprep.subr.bf16.mxu0 0
    %467 = vmatpush1.bf16.msra.mxu0 %v445
    %468 = vmatprep.subr.bf16.mxu0 0
    %469 = vmatpush1.bf16.msra.mxu0 %v446
    %470 = vmatprep.subr.bf16.mxu0 0
    %471 = vmatpush1.bf16.msra.mxu0 %v447
    %472 = vmatprep.subr.bf16.mxu0 0
    %473 = vmatpush1.bf16.msra.mxu0 0
    %474 = vmatprep.subr.bf16.mxu0 0
    %475 = vmatpush1.bf16.msra.mxu0 0
    %476 = vmatprep.subr.bf16.mxu0 0
    %477 = vmatpush1.bf16.msra.mxu0 0
    %478 = vmatprep.subr.bf16.mxu0 0
    %479 = vmatpush1.bf16.msra.mxu0 0
    %480 = vmatprep.subr.bf16.mxu0 0
    %481 = vmatpush1.bf16.msra.mxu0 0
    %482 = vmatprep.subr.bf16.mxu0 0
    %483 = vmatpush1.bf16.msra.mxu0 0
    %484 = vmatprep.subr.bf16.mxu0 0
    %485 = vmatpush1.bf16.msra.mxu0 0
    %486 = vmatprep.subr.bf16.mxu0 0
    %487 = vmatpush1.bf16.msra.mxu0 0
    %488 = vmatprep.mubr.bf16.mxu0 0
    %489 = vmatmul.mubr.bf16.gmra.mrb[0].mxu0 %v384
    %v490 = vpop.f32.mrb[0].mxu0
    %v491 = vadd.f32 %v406, %v490
    %v492 = vpop.f32.mrb[0].mxu0
    %v493 = vpop.f32.mrb[0].mxu0
    %v494 = vpop.f32.mrb[0].mxu0
    %495 = vdwg.mxu0
    %496 = vst [vmem:[#allocation10] sm:$0x3] %v491
    // Predicated region
    $region46: #{tpu_custom_call.1} parent=1 // pred_check
      _
    $region47: #{tpu_custom_call.1} parent=1 // pred_check_branch
      %498 = sbr.rel (0) target = $region49
    $region48: #{tpu_custom_call.1} parent=1 // pred_region
      %s500 = ssub.s32 32, 32
      %501 = vsyncadd [#allocation4], %s500
      %s503 = sshll.u32 [#allocation10], 4
      %s504 = int_to_ptr.vmem [resolvable:$true] %s503
      %506 = dma.vmem_to_hbm [thread:$0]  %s504, 32, %s7, [#allocation4]
    $region49: #{tpu_custom_call.1} parent=1 // pred_fallthru
      _
    // Predicated region
    $region50: #{tpu_custom_call.1} parent=1 // pred_check
      _
    $region51: #{tpu_custom_call.1} parent=1 // pred_check_branch
      %508 = sbr.rel (0) target = $region53
    $region52: #{tpu_custom_call.1} parent=1 // pred_region
      %509 = dma.done [#allocation4], 32
    $region53: #{tpu_custom_call.1} parent=1 // pred_fallthru
      _
    %510 = vsyncpa [#allocation3], 1
    %511 = vsyncpa [#allocation6], 1
    %512 = vsyncpa [#allocation9], 1
    %513 = vsyncpa [#allocation4], 1

</llo_original>
